<compile_context>
chip_gen: v5e
topology: v5e:2x2
jax: 0.10.0
libtpu: 0.0.40
codegen_flags: <defaults>
</compile_context>

<pallas_src>
import functools
import math

import jax
import jax.numpy as jnp
from jax.experimental import pallas as pl
from jax.experimental.pallas import tpu as pltpu

BN_EPS = 1e-5


# ------------------------------ Pallas kernel --------------------------------
def _classblock_kernel(x_ref, w1_ref, s1_ref, b1_ref, w2_ref, b2_ref,
                       logits_ref, f_ref, *, relu, slope):
    # add_block: Linear + folded (eval-mode) BatchNorm1d (+ optional LeakyReLU(0.1))
    y = jnp.dot(x_ref[...], w1_ref[...], preferred_element_type=jnp.float32)
    y = y * s1_ref[...] + b1_ref[...]
    if relu:
        y = jnp.where(y >= 0.0, y, slope * y)

    # f = y / (||y||_2 + 1e-8)   (row-wise L2 normalization of the bottleneck feature)
    norm = jnp.sqrt(jnp.sum(y * y, axis=1, keepdims=True)) + 1e-8
    f_ref[...] = (y / norm).astype(f_ref.dtype)

    # classifier: Dropout (identity at inference) + Linear  -- applied to UN-normalized y
    logits = jnp.dot(y, w2_ref[...], preferred_element_type=jnp.float32) + b2_ref[...]
    logits_ref[...] = logits.astype(logits_ref.dtype)


def class_block_forward(x, params, *, relu=False, block_m=8):
    """Fused ClassBlock forward. x: (B, input_dim) f32. Returns (logits, f)."""
    B, D = x.shape
    H = params["w1"].shape[1]
    C = params["w2"].shape[1]

    # Tile the batch when it is a clean multiple of block_m; otherwise one full block.
    tm = block_m if (B >= block_m and B % block_m == 0) else B
    grid = (B // tm,)

    kern = functools.partial(_classblock_kernel, relu=relu, slope=0.1)
    logits, f = pl.pallas_call(
        kern,
        grid=grid,
        out_shape=(jax.ShapeDtypeStruct((B, C), jnp.float32),
                   jax.ShapeDtypeStruct((B, H), jnp.float32)),
        in_specs=[
            pl.BlockSpec((tm, D), lambda i: (i, 0)),   # activations: pipelined over batch
            pl.BlockSpec((D, H), lambda i: (0, 0)),    # weights: resident across tiles
            pl.BlockSpec((1, H), lambda i: (0, 0)),
            pl.BlockSpec((1, H), lambda i: (0, 0)),
            pl.BlockSpec((H, C), lambda i: (0, 0)),
            pl.BlockSpec((1, C), lambda i: (0, 0)),
        ],
        out_specs=(pl.BlockSpec((tm, C), lambda i: (i, 0)),
                   pl.BlockSpec((tm, H), lambda i: (i, 0))),
        compiler_params=pltpu.CompilerParams(dimension_semantics=("parallel",)),
    )(x, params["w1"], params["s1"], params["b1"], params["w2"], params["b2"])
    return logits, f


# ------------------------------ parameters -----------------------------------
def init_params(key, input_dim, num_bottleneck, class_num):
    """Matches weights_init_kaiming / weights_init_classifier + default BN buffers."""
    k1, k2, k3 = jax.random.split(key, 3)

    # add_block Linear: kaiming_normal_(mode='fan_out') -> std = sqrt(2 / out_features); bias = 0
    w1 = jax.random.normal(k1, (input_dim, num_bottleneck), jnp.float32) * math.sqrt(
        2.0 / num_bottleneck)
    b1_lin = jnp.zeros((num_bottleneck,), jnp.float32)

    # BatchNorm1d: weight ~ N(1, 0.02), bias = 0; eval-mode running stats (mean=0, var=1).
    # TODO(synk): training-mode BatchNorm (batch statistics) not implemented; eval-mode fold used.
    gamma = 1.0 + 0.02 * jax.random.normal(k2, (num_bottleneck,), jnp.float32)
    beta = jnp.zeros((num_bottleneck,), jnp.float32)
    run_mean = jnp.zeros((num_bottleneck,), jnp.float32)
    run_var = jnp.ones((num_bottleneck,), jnp.float32)
    scale = gamma / jnp.sqrt(run_var + BN_EPS)
    shift = (b1_lin - run_mean) * scale + beta   # Linear bias + BN folded into one shift

    # classifier Linear: weight ~ N(0, 0.001), bias = 0
    # TODO(synk): classifier Dropout(p=0.5) is inference-mode identity (no training-mode mask).
    w2 = 0.001 * jax.random.normal(k3, (num_bottleneck, class_num), jnp.float32)
    b2 = jnp.zeros((class_num,), jnp.float32)

    return {"w1": w1,
            "s1": scale.reshape(1, num_bottleneck),
            "b1": shift.reshape(1, num_bottleneck),
            "w2": w2,
            "b2": b2.reshape(1, class_num)}


# --------------------------------- main ---------------------------------------
if __name__ == "__main__":
    INPUT_DIM = 64       # scaled-down input_dim
    NUM_BOTTLENECK = 128 # scaled-down num_bottleneck (lane-dense: multiple of 128)
    CLASS_NUM = 16       # scaled-down class_num
    BATCH = 16

    key = jax.random.PRNGKey(0)
    pkey, xkey = jax.random.split(key)
    params = init_params(pkey, INPUT_DIM, NUM_BOTTLENECK, CLASS_NUM)
    x = jax.random.normal(xkey, (BATCH, INPUT_DIM), jnp.float32)

    # pure-JAX reference (same folded parameters)
    def reference(x, p, relu):
        y = x @ p["w1"] * p["s1"] + p["b1"]
        if relu:
            y = jnp.where(y >= 0.0, y, 0.1 * y)
        f = y / (jnp.sqrt(jnp.sum(y * y, axis=1, keepdims=True)) + 1e-8)
        return y @ p["w2"] + p["b2"], f

    for relu_flag in (False, True):
        fwd = jax.jit(functools.partial(class_block_forward, relu=relu_flag))
        logits, f = jax.block_until_ready(fwd(x, params))
        logits_ref, f_ref = reference(x, params, relu_flag)

        assert logits.shape == (BATCH, CLASS_NUM)
        assert f.shape == (BATCH, NUM_BOTTLENECK)
        assert jnp.allclose(logits, logits_ref, atol=1e-5, rtol=1e-5)
        assert jnp.allclose(f, f_ref, atol=1e-5, rtol=1e-5)
        assert jnp.allclose(jnp.linalg.norm(f, axis=1), 1.0, atol=1e-4)

    print("KERNEL_OK")
</pallas_src>

<mosaic_0001>
module attributes {stable_mosaic.version = 11 : i64} {
  func.func @_classblock_kernel(%arg0: i32, %arg1: memref<8x64xf32, #tpu.memory_space<vmem>>, %arg2: memref<64x128xf32, #tpu.memory_space<vmem>>, %arg3: memref<1x128xf32, #tpu.memory_space<vmem>>, %arg4: memref<1x128xf32, #tpu.memory_space<vmem>>, %arg5: memref<128x16xf32, #tpu.memory_space<vmem>>, %arg6: memref<1x16xf32, #tpu.memory_space<vmem>>, %arg7: memref<8x16xf32, #tpu.memory_space<vmem>>, %arg8: memref<8x128xf32, #tpu.memory_space<vmem>>) attributes {dimension_semantics = [#tpu.dimension_semantics<parallel>], iteration_bounds = array<i64: 2>, scalar_prefetch = 0 : i64, scratch_operands = 0 : i64, tpu.core_type = #tpu.core_type<tc>, window_params = [{transform_indices = @transform_0, window_bounds = array<i64: 8, 64>}, {pipeline_mode = #tpu.pipeline_mode<synchronous>, transform_indices = @transform_1, window_bounds = array<i64: 64, 128>}, {pipeline_mode = #tpu.pipeline_mode<synchronous>, transform_indices = @transform_2, window_bounds = array<i64: 1, 128>}, {pipeline_mode = #tpu.pipeline_mode<synchronous>, transform_indices = @transform_3, window_bounds = array<i64: 1, 128>}, {pipeline_mode = #tpu.pipeline_mode<synchronous>, transform_indices = @transform_4, window_bounds = array<i64: 128, 16>}, {pipeline_mode = #tpu.pipeline_mode<synchronous>, transform_indices = @transform_5, window_bounds = array<i64: 1, 16>}, {transform_indices = @transform_6, window_bounds = array<i64: 8, 16>}, {transform_indices = @transform_7, window_bounds = array<i64: 8, 128>}]} {
    %c0 = arith.constant 0 : index
    %c0_0 = arith.constant 0 : index
    %0 = vector.load %arg1[%c0, %c0_0] : memref<8x64xf32, #tpu.memory_space<vmem>>, vector<8x64xf32>
    %c0_1 = arith.constant 0 : index
    %c0_2 = arith.constant 0 : index
    %1 = vector.load %arg2[%c0_1, %c0_2] : memref<64x128xf32, #tpu.memory_space<vmem>>, vector<64x128xf32>
    %cst = arith.constant dense<0.000000e+00> : vector<8x128xf32>
    %2 = tpu.matmul %0, %1, %cst {dimension_numbers = #tpu.dot_dimension_numbers<[1], [0], [0], [1], [0, 0, 1, 1], [], []>} : vector<8x64xf32>, vector<64x128xf32>, vector<8x128xf32> -> vector<8x128xf32>
    %c0_3 = arith.constant 0 : index
    %c0_4 = arith.constant 0 : index
    %3 = vector.load %arg3[%c0_3, %c0_4] : memref<1x128xf32, #tpu.memory_space<vmem>>, vector<1x128xf32>
    %4 = vector.broadcast %3 : vector<1x128xf32> to vector<8x128xf32>
    %5 = arith.mulf %2, %4 : vector<8x128xf32>
    %c0_5 = arith.constant 0 : index
    %c0_6 = arith.constant 0 : index
    %6 = vector.load %arg4[%c0_5, %c0_6] : memref<1x128xf32, #tpu.memory_space<vmem>>, vector<1x128xf32>
    %7 = vector.broadcast %6 : vector<1x128xf32> to vector<8x128xf32>
    %8 = arith.addf %5, %7 : vector<8x128xf32>
    %9 = arith.mulf %8, %8 : vector<8x128xf32>
    %cst_7 = arith.constant dense<0.000000e+00> : vector<8xf32>
    %10 = vector.multi_reduction <add>, %9, %cst_7 [1] : vector<8x128xf32> to vector<8xf32>
    %11 = vector.shape_cast %10 : vector<8xf32> to vector<8x1xf32>
    %12 = math.sqrt %11 : vector<8x1xf32>
    %cst_8 = arith.constant 9.99999993E-9 : f32
    %13 = vector.broadcast %cst_8 : f32 to vector<8x1xf32>
    %14 = arith.addf %12, %13 : vector<8x1xf32>
    %15 = vector.broadcast %14 : vector<8x1xf32> to vector<8x128xf32>
    %16 = arith.divf %8, %15 : vector<8x128xf32>
    %c0_9 = arith.constant 0 : index
    %c0_10 = arith.constant 0 : index
    %17 = vector.load %arg8[%c0_9, %c0_10] : memref<8x128xf32, #tpu.memory_space<vmem>>, vector<8x128xf32>
    tpu.vector_store %arg8[%c0_9, %c0_10], %16 {strides = array<i32>} : memref<8x128xf32, #tpu.memory_space<vmem>>, vector<8x128xf32>,
    %c0_11 = arith.constant 0 : index
    %c0_12 = arith.constant 0 : index
    %18 = vector.load %arg5[%c0_11, %c0_12] : memref<128x16xf32, #tpu.memory_space<vmem>>, vector<128x16xf32>
    %cst_13 = arith.constant dense<0.000000e+00> : vector<8x16xf32>
    %19 = tpu.matmul %8, %18, %cst_13 {dimension_numbers = #tpu.dot_dimension_numbers<[1], [0], [0], [1], [0, 0, 1, 1], [], []>} : vector<8x128xf32>, vector<128x16xf32>, vector<8x16xf32> -> vector<8x16xf32>
    %c0_14 = arith.constant 0 : index
    %c0_15 = arith.constant 0 : index
    %20 = vector.load %arg6[%c0_14, %c0_15] : memref<1x16xf32, #tpu.memory_space<vmem>>, vector<1x16xf32>
    %21 = vector.broadcast %20 : vector<1x16xf32> to vector<8x16xf32>
    %22 = arith.addf %19, %21 : vector<8x16xf32>
    %c0_16 = arith.constant 0 : index
    %c0_17 = arith.constant 0 : index
    %23 = vector.load %arg7[%c0_16, %c0_17] : memref<8x16xf32, #tpu.memory_space<vmem>>, vector<8x16xf32>
    tpu.vector_store %arg7[%c0_16, %c0_17], %22 {strides = array<i32>} : memref<8x16xf32, #tpu.memory_space<vmem>>, vector<8x16xf32>,
    return
  }
  func.func @transform_0(%arg0: i32) -> (i32, i32) {
    %c0_i32 = arith.constant 0 : i32
    %c0_i32_0 = arith.constant 0 : i32
    return %arg0, %c0_i32 : i32, i32
  }
  func.func @transform_1(%arg0: i32) -> (i32, i32) {
    %c0_i32 = arith.constant 0 : i32
    %c0_i32_0 = arith.constant 0 : i32
    %c0_i32_1 = arith.constant 0 : i32
    return %c0_i32, %c0_i32_0 : i32, i32
  }
  func.func @transform_2(%arg0: i32) -> (i32, i32) {
    %c0_i32 = arith.constant 0 : i32
    %c0_i32_0 = arith.constant 0 : i32
    %c0_i32_1 = arith.constant 0 : i32
    return %c0_i32, %c0_i32_0 : i32, i32
  }
  func.func @transform_3(%arg0: i32) -> (i32, i32) {
    %c0_i32 = arith.constant 0 : i32
    %c0_i32_0 = arith.constant 0 : i32
    %c0_i32_1 = arith.constant 0 : i32
    return %c0_i32, %c0_i32_0 : i32, i32
  }
  func.func @transform_4(%arg0: i32) -> (i32, i32) {
    %c0_i32 = arith.constant 0 : i32
    %c0_i32_0 = arith.constant 0 : i32
    %c0_i32_1 = arith.constant 0 : i32
    return %c0_i32, %c0_i32_0 : i32, i32
  }
  func.func @transform_5(%arg0: i32) -> (i32, i32) {
    %c0_i32 = arith.constant 0 : i32
    %c0_i32_0 = arith.constant 0 : i32
    %c0_i32_1 = arith.constant 0 : i32
    return %c0_i32, %c0_i32_0 : i32, i32
  }
  func.func @transform_6(%arg0: i32) -> (i32, i32) {
    %c0_i32 = arith.constant 0 : i32
    %c0_i32_0 = arith.constant 0 : i32
    return %arg0, %c0_i32 : i32, i32
  }
  func.func @transform_7(%arg0: i32) -> (i32, i32) {
    %c0_i32 = arith.constant 0 : i32
    %c0_i32_0 = arith.constant 0 : i32
    return %arg0, %c0_i32 : i32, i32
  }
}

</mosaic_0001>

<llo_original>
// kernel: class_block_forward.1
$region0: #{class_block_forward.1}
  #allocation0 [shape = 'u32[]', space=smem, size = 0x4, offset = 0x4, fixed_abs, tag = 'smem constant byte address 0x4 - core index']
  #allocation1 [shape = 'u32[72,128]{1,0:T(1,128)}', space=vmem, size = 0x9000, scoped, tag = 'internal scratch']
  %s0 = inlined_call_operand.vmem [shape: f32[16,64], index: 0, kind: input, shape index: {}]
  %s1 = inlined_call_operand.vmem [shape: f32[64,128], index: 1, kind: input, shape index: {}]
  %s2 = inlined_call_operand.vmem [shape: f32[1,128], index: 2, kind: input, shape index: {}]
  %s3 = inlined_call_operand.vmem [shape: f32[1,128], index: 3, kind: input, shape index: {}]
  %s4 = inlined_call_operand.vmem [shape: f32[128,16], index: 4, kind: input, shape index: {}]
  %s5 = inlined_call_operand.vmem [shape: f32[1,16], index: 5, kind: input, shape index: {}]
  %s6 = inlined_call_operand.hbm [shape: f32[16,16], index: 6, kind: output, shape index: {0}]
  %s7 = inlined_call_operand.hbm [shape: f32[16,128], index: 7, kind: output, shape index: {1}]
  %8 = xla_tuple %s6, %s7
  %s9 = sld [smem:[#allocation0]]
  $region65: #{class_block_forward.1} parent=0
    _
  %s11 = ssub.s32 1, %s9
  %s12 = scalar_select 0, %s11, %s9
  $region1: #{class_block_forward.1} parent=0
    #allocation2 [shape = 'u8[8192]{0}', space=vmem, size = 0x2000, scoped, tag = 'output window, operand 0']
    #allocation3 [shape = 's32[2]{0}', space=sflag, size = 0x8, scoped, tag = 'scoped memory for class_block_forward.1']
    #allocation4 [shape = 'u8[8192]{0}', space=vmem, size = 0x2000, scoped, tag = 'output window, operand 1']
    #allocation5 [shape = 's32[2]{0}', space=sflag, size = 0x8, scoped, tag = 'scoped memory for class_block_forward.1']
    %13 = vsyncpa [#allocation3], 0
    %s14 = scalar_lea.sflag [#allocation3], 1
    %15 = vsyncpa %s14, 0
    %16 = vsyncpa [#allocation5], 0
    %s17 = scalar_lea.sflag [#allocation5], 1
    %18 = vsyncpa %s17, 0
    loop: start=0, step=1, limit=4
    $region2: #{class_block_forward.1} parent=1 // loop_pre_header
      _
    $region3: #{class_block_forward.1} parent=1 // loop_header
      %s20 = sphi 0, %s24
      %p21 = scmp.ge.s32.totalorder %s20, 4
      %s30 = sphi 0, %s32
      %s33 = sphi 0, %s30
      %s34 = sphi 0, %s33
      %s50 = sphi 0, %s34
      %s54 = sphi 0, %s54
      %s56 = sphi 0, %s54
      %s57 = sphi 0, %s56
      %s71 = sphi 0, %s57
      %s75 = sphi 0, %s75
      %s77 = sphi 0, %s75
      %s78 = sphi 0, %s77
      %s92 = sphi 0, %s78
      %s96 = sphi 0, %s96
      %s98 = sphi 0, %s96
      %s99 = sphi 0, %s98
      %s113 = sphi 0, %s99
      %s117 = sphi 0, %s117
      %s119 = sphi 0, %s117
      %s120 = sphi 0, %s119
      %s134 = sphi 0, %s120
      %s138 = sphi 0, %s138
      %s140 = sphi 0, %s138
      %s141 = sphi 0, %s140
      %s155 = sphi 0, %s141
      %s161 = sphi 0, %s163
      %s164 = sphi 0, %s161
      %s165 = sphi 0, %s164
      %s181 = sphi 0, %s165
      %s187 = sphi 0, %s189
      %s190 = sphi 0, %s187
      %s191 = sphi 0, %s190
      %s207 = sphi 0, %s191
    $region4: #{class_block_forward.1} parent=1 // loop_header_branch
      %23 = sbr.rel (%p21) target = $region8
    $region5: #{class_block_forward.1} parent=1 // loop_body
      %s25 = ssub.s32 %s20, 1
      %s26 = ssub.s32 %s20, 2
      %s27 = sadd.s32 %s20, 1
      %s28 = ssub.s32 %s20, %s27
      %p29 = scmp.eq.s32.totalorder %s28, 0
      %s31 = sadd.s32 %s30, 1
      %s32 = scalar_select %p29, %s30, %s31
      %p35 = pneg %p29
      %p36 = scmp.eq.s32.totalorder %s20, 1
      %p37 = por %p35, %p36
      %p38 = scmp.ne.s32.totalorder %s30, %s33
      %p39 = scmp.eq.s32.totalorder %s20, 0
      %p40 = por %p38, %p39
      %p41 = scmp.ne.s32.totalorder %s30, %s33
      %p42 = scmp.eq.s32.totalorder %s25, 1
      %p43 = por %p41, %p42
      %p44 = scmp.ne.s32.totalorder %s33, %s34
      %p45 = scmp.eq.s32.totalorder %s25, 0
      %p46 = por %p44, %p45
      %p47 = scmp.ne.s32.totalorder %s33, %s34
      %p48 = scmp.eq.s32.totalorder %s26, 1
      %p49 = por %p47, %p48
      %p51 = scmp.ne.s32.totalorder %s34, %s50
      %p52 = scmp.eq.s32.totalorder %s26, 0
      %p53 = por %p51, %p52
      %s55 = sadd.s32 %s54, 1
      %p58 = scmp.eq.s32.totalorder %s20, 1
      %p59 = scmp.ne.s32.totalorder %s54, %s56
      %p60 = scmp.eq.s32.totalorder %s20, 0
      %p61 = por %p59, %p60
      %p62 = scmp.ne.s32.totalorder %s54, %s56
      %p63 = scmp.eq.s32.totalorder %s25, 1
      %p64 = por %p62, %p63
      %p65 = scmp.ne.s32.totalorder %s56, %s57
      %p66 = scmp.eq.s32.totalorder %s25, 0
      %p67 = por %p65, %p66
      %p68 = scmp.ne.s32.totalorder %s56, %s57
      %p69 = scmp.eq.s32.totalorder %s26, 1
      %p70 = por %p68, %p69
      %p72 = scmp.ne.s32.totalorder %s57, %s71
      %p73 = scmp.eq.s32.totalorder %s26, 0
      %p74 = por %p72, %p73
      %s76 = sadd.s32 %s75, 1
      %p79 = scmp.eq.s32.totalorder %s20, 1
      %p80 = scmp.ne.s32.totalorder %s75, %s77
      %p81 = scmp.eq.s32.totalorder %s20, 0
      %p82 = por %p80, %p81
      %p83 = scmp.ne.s32.totalorder %s75, %s77
      %p84 = scmp.eq.s32.totalorder %s25, 1
      %p85 = por %p83, %p84
      %p86 = scmp.ne.s32.totalorder %s77, %s78
      %p87 = scmp.eq.s32.totalorder %s25, 0
      %p88 = por %p86, %p87
      %p89 = scmp.ne.s32.totalorder %s77, %s78
      %p90 = scmp.eq.s32.totalorder %s26, 1
      %p91 = por %p89, %p90
      %p93 = scmp.ne.s32.totalorder %s78, %s92
      %p94 = scmp.eq.s32.totalorder %s26, 0
      %p95 = por %p93, %p94
      %s97 = sadd.s32 %s96, 1
      %p100 = scmp.eq.s32.totalorder %s20, 1
      %p101 = scmp.ne.s32.totalorder %s96, %s98
      %p102 = scmp.eq.s32.totalorder %s20, 0
      %p103 = por %p101, %p102
      %p104 = scmp.ne.s32.totalorder %s96, %s98
      %p105 = scmp.eq.s32.totalorder %s25, 1
      %p106 = por %p104, %p105
      %p107 = scmp.ne.s32.totalorder %s98, %s99
      %p108 = scmp.eq.s32.totalorder %s25, 0
      %p109 = por %p107, %p108
      %p110 = scmp.ne.s32.totalorder %s98, %s99
      %p111 = scmp.eq.s32.totalorder %s26, 1
      %p112 = por %p110, %p111
      %p114 = scmp.ne.s32.totalorder %s99, %s113
      %p115 = scmp.eq.s32.totalorder %s26, 0
      %p116 = por %p114, %p115
      %s118 = sadd.s32 %s117, 1
      %p121 = scmp.eq.s32.totalorder %s20, 1
      %p122 = scmp.ne.s32.totalorder %s117, %s119
      %p123 = scmp.eq.s32.totalorder %s20, 0
      %p124 = por %p122, %p123
      %p125 = scmp.ne.s32.totalorder %s117, %s119
      %p126 = scmp.eq.s32.totalorder %s25, 1
      %p127 = por %p125, %p126
      %p128 = scmp.ne.s32.totalorder %s119, %s120
      %p129 = scmp.eq.s32.totalorder %s25, 0
      %p130 = por %p128, %p129
      %p131 = scmp.ne.s32.totalorder %s119, %s120
      %p132 = scmp.eq.s32.totalorder %s26, 1
      %p133 = por %p131, %p132
      %p135 = scmp.ne.s32.totalorder %s120, %s134
      %p136 = scmp.eq.s32.totalorder %s26, 0
      %p137 = por %p135, %p136
      %s139 = sadd.s32 %s138, 1
      %p142 = scmp.eq.s32.totalorder %s20, 1
      %p143 = scmp.ne.s32.totalorder %s138, %s140
      %p144 = scmp.eq.s32.totalorder %s20, 0
      %p145 = por %p143, %p144
      %p146 = scmp.ne.s32.totalorder %s138, %s140
      %p147 = scmp.eq.s32.totalorder %s25, 1
      %p148 = por %p146, %p147
      %p149 = scmp.ne.s32.totalorder %s140, %s141
      %p150 = scmp.eq.s32.totalorder %s25, 0
      %p151 = por %p149, %p150
      %p152 = scmp.ne.s32.totalorder %s140, %s141
      %p153 = scmp.eq.s32.totalorder %s26, 1
      %p154 = por %p152, %p153
      %p156 = scmp.ne.s32.totalorder %s141, %s155
      %p157 = scmp.eq.s32.totalorder %s26, 0
      %p158 = por %p156, %p157
      %s159 = ssub.s32 %s20, %s27
      %p160 = scmp.eq.s32.totalorder %s159, 0
      %s162 = sadd.s32 %s161, 1
      %s163 = scalar_select %p160, %s161, %s162
      %p166 = pneg %p160
      %p167 = scmp.eq.s32.totalorder %s20, 1
      %p168 = por %p166, %p167
      %p169 = scmp.ne.s32.totalorder %s161, %s164
      %p170 = scmp.eq.s32.totalorder %s20, 0
      %p171 = por %p169, %p170
      %p172 = scmp.ne.s32.totalorder %s161, %s164
      %p173 = scmp.eq.s32.totalorder %s25, 1
      %p174 = por %p172, %p173
      %p175 = scmp.ne.s32.totalorder %s164, %s165
      %p176 = scmp.eq.s32.totalorder %s25, 0
      %p177 = por %p175, %p176
      %p178 = scmp.ne.s32.totalorder %s164, %s165
      %p179 = scmp.eq.s32.totalorder %s26, 1
      %p180 = por %p178, %p179
      %p182 = scmp.ne.s32.totalorder %s165, %s181
      %p183 = scmp.eq.s32.totalorder %s26, 0
      %p184 = por %p182, %p183
      %s185 = ssub.s32 %s20, %s27
      %p186 = scmp.eq.s32.totalorder %s185, 0
      %s188 = sadd.s32 %s187, 1
      %s189 = scalar_select %p186, %s187, %s188
      %p192 = pneg %p186
      %p193 = scmp.eq.s32.totalorder %s20, 1
      %p194 = por %p192, %p193
      %p195 = scmp.ne.s32.totalorder %s187, %s190
      %p196 = scmp.eq.s32.totalorder %s20, 0
      %p197 = por %p195, %p196
      %p198 = scmp.ne.s32.totalorder %s187, %s190
      %p199 = scmp.eq.s32.totalorder %s25, 1
      %p200 = por %p198, %p199
      %p201 = scmp.ne.s32.totalorder %s190, %s191
      %p202 = scmp.eq.s32.totalorder %s25, 0
      %p203 = por %p201, %p202
      %p204 = scmp.ne.s32.totalorder %s190, %s191
      %p205 = scmp.eq.s32.totalorder %s26, 1
      %p206 = por %p204, %p205
      %p208 = scmp.ne.s32.totalorder %s191, %s207
      %p209 = scmp.eq.s32.totalorder %s26, 0
      %p210 = por %p208, %p209
      %p211 = scmp.le.s32.totalorder 1, %s20
      %p212 = scmp.lt.s32.totalorder %s20, 3
      %p213 = pnand %p211, %p212
      %p214 = pneg %p213
      // Predicated region
      $region9: #{class_block_forward.1} parent=5 // pred_check
        _
      $region10: #{class_block_forward.1} parent=5 // pred_check_branch
        %216 = sbr.rel (%p213) target = $region12
      $region11: #{class_block_forward.1} parent=5 // pred_region
        %s217 = ssub.s32 %s20, 1
        // Predicated region
        $region13: #{class_block_forward.1} parent=11 // pred_check
          %p218 = pneg %p67
        $region14: #{class_block_forward.1} parent=11 // pred_check_branch
          %220 = sbr.rel (%p218) target = $region16
        $region15: #{class_block_forward.1} parent=11 // pred_region
          _
        $region16: #{class_block_forward.1} parent=11 // pred_fallthru
          _
        // Predicated region
        $region17: #{class_block_forward.1} parent=11 // pred_check
          %p221 = pneg %p88
        $region18: #{class_block_forward.1} parent=11 // pred_check_branch
          %223 = sbr.rel (%p221) target = $region20
        $region19: #{class_block_forward.1} parent=11 // pred_region
          _
        $region20: #{class_block_forward.1} parent=11 // pred_fallthru
          _
        // Predicated region
        $region21: #{class_block_forward.1} parent=11 // pred_check
          %p224 = pneg %p109
        $region22: #{class_block_forward.1} parent=11 // pred_check_branch
          %226 = sbr.rel (%p224) target = $region24
        $region23: #{class_block_forward.1} parent=11 // pred_region
          _
        $region24: #{class_block_forward.1} parent=11 // pred_fallthru
          _
        // Predicated region
        $region25: #{class_block_forward.1} parent=11 // pred_check
          %p227 = pneg %p130
        $region26: #{class_block_forward.1} parent=11 // pred_check_branch
          %229 = sbr.rel (%p227) target = $region28
        $region27: #{class_block_forward.1} parent=11 // pred_region
          _
        $region28: #{class_block_forward.1} parent=11 // pred_fallthru
          _
        // Predicated region
        $region29: #{class_block_forward.1} parent=11 // pred_check
          %p230 = pneg %p151
        $region30: #{class_block_forward.1} parent=11 // pred_check_branch
          %232 = sbr.rel (%p230) target = $region32
        $region31: #{class_block_forward.1} parent=11 // pred_region
          _
        $region32: #{class_block_forward.1} parent=11 // pred_fallthru
          _
      $region12: #{class_block_forward.1} parent=5 // pred_fallthru
        _
      %p233 = scmp.lt.s32.totalorder %s20, 2
      // Predicated region
      $region33: #{class_block_forward.1} parent=5 // pred_check
        %p234 = pneg %p233
      $region34: #{class_block_forward.1} parent=5 // pred_check_branch
        %236 = sbr.rel (%p234) target = $region36
      $region35: #{class_block_forward.1} parent=5 // pred_region
        // Predicated region
        $region37: #{class_block_forward.1} parent=35 // pred_check
          %p237 = pneg %p40
        $region38: #{class_block_forward.1} parent=35 // pred_check_branch
          %239 = sbr.rel (%p237) target = $region40
        $region39: #{class_block_forward.1} parent=35 // pred_region
          %p240 = scmp.lt.s32.totalorder %s20, 1
          %s241 = scalar_select %p240, %s20, 1
          %s242 = smul.addr %s241, 8
          %s243 = scalar_lea.vmem %s0, %s242
        $region40: #{class_block_forward.1} parent=35 // pred_fallthru
          _
      $region36: #{class_block_forward.1} parent=5 // pred_fallthru
        _
      %p244 = scmp.le.s32.totalorder 1, %s20
      %p245 = scmp.lt.s32.totalorder %s20, 3
      %p246 = pnand %p244, %p245
      %p247 = pneg %p246
      // Predicated region
      $region41: #{class_block_forward.1} parent=5 // pred_check
        _
      $region42: #{class_block_forward.1} parent=5 // pred_check_branch
        %249 = sbr.rel (%p246) target = $region44
      $region43: #{class_block_forward.1} parent=5 // pred_region
        %s250 = ssub.s32 %s20, 1
        %p251 = scmp.lt.s32.totalorder %s25, 1
        %s252 = scalar_select %p251, %s25, 1
        %s253 = smul.addr %s252, 8
        %s254 = scalar_lea.vmem %s0, %s253
        %p255 = pneg %p46
        %p256 = pneg %p43
        %p257 = pneg %p67
        %p258 = pneg %p64
        %p259 = pneg %p88
        %p260 = pneg %p85
        %p261 = pneg %p109
        %p262 = pneg %p106
        %p263 = pneg %p130
        %p264 = pneg %p127
        %p265 = pneg %p151
        %p266 = pneg %p148
        %p267 = pneg %p177
        %p268 = pneg %p174
        %s269 = sand.u32 %s164, 1
        %s270 = scalar_lea.sflag [#allocation3], %s269
        %s271 = sand.u32 %s164, 1
        %s272 = smul.addr %s271, 8
        %s273 = scalar_lea.vmem [#allocation2], %s272
        %p274 = pneg %p203
        %p275 = pneg %p200
        %s276 = sand.u32 %s190, 1
        %s277 = scalar_lea.sflag [#allocation5], %s276
        %s278 = sand.u32 %s190, 1
        %s279 = smul.addr %s278, 8
        %s280 = scalar_lea.vmem [#allocation4], %s279
        %p281 = scmp.lt.s32.totalorder %s25, 1
        %s282 = scalar_select %p281, %s25, 1
        %s283 = smul.addr %s282, 8
        %s284 = scalar_lea.vmem %s0, %s283
        %v285 = vld [vmem:[%s284] sm:$0xff]
        %v286 = vld [vmem:[%s1] sm:$0xff]
        %v287 = vld [vmem:[%s1 + $0x8] sm:$0xff]
        %v288 = vld [vmem:[%s1 + $0x10] sm:$0xff]
        %v289 = vld [vmem:[%s1 + $0x18] sm:$0xff]
        %v290 = vld [vmem:[%s1 + $0x20] sm:$0xff]
        %v291 = vld [vmem:[%s1 + $0x28] sm:$0xff]
        %v292 = vld [vmem:[%s1 + $0x30] sm:$0xff]
        %v293 = vld [vmem:[%s1 + $0x38] sm:$0xff]
        %vm294 = vcmask 523264
        %v296 = vsel %vm294, %v285, 0
        %298 = vmatpush.msra.mxu0 0.0
        %299 = vmatpush.msra.mxu0 0.0
        %300 = vmatpush.msra.mxu0 0.0
        %301 = vmatpush.msra.mxu0 0.0
        %302 = vmatpush.msra.mxu0 0.0
        %303 = vmatpush.msra.mxu0 0.0
        %304 = vmatpush.msra.mxu0 0.0
        %305 = vmatpush.msra.mxu0 0.0
        %306 = vmatpush.msra.mxu0 %v293
        %307 = vmatpush.msra.mxu0 %v292
        %308 = vmatpush.msra.mxu0 %v291
        %309 = vmatpush.msra.mxu0 %v290
        %310 = vmatpush.msra.mxu0 %v289
        %311 = vmatpush.msra.mxu0 %v288
        %312 = vmatpush.msra.mxu0 %v287
        %313 = vmatpush.msra.mxu0 %v286
        %314 = vmatmul.f32.gmra.mxu0 %v296
        %v315 = vpop.f32.mrf.mxu0
        %v316 = vadd.f32 0.0, %v315
        %317 = vdwg.mxu0
        %v318 = vld [vmem:[%s2] sm:$0x1]
        %v320 = vperm.slane %v318, 0
        %v322 = vmul.f32 %v316, %v320
        %v323 = vld [vmem:[%s3] sm:$0x1]
        %v325 = vperm.slane %v323, 0
        %v327 = vadd.f32 %v322, %v325
        %v328 = vmul.f32 %v327, %v327
        %329 = vadd.xlane.f32.xlu0 %v328
        %v330 = vpop.xlane.xlu0 %329
        %v331 = vrsqrt.pop %v330
        %v332 = vmul.f32 %v331, %v330
        %v333 = vmul.f32 %v332, %v331
        %v334 = vmul.f32 0.5, %v333
        %v335 = vsub.f32 1.5, %v334
        %v336 = vmul.f32 %v331, %v335
        %v337 = vmul.f32 %v330, %v336
        %vm338 = vcmp.eq.f32.partialorder %v330, inf
        %v339 = vsel %vm338, %v330, %v337
        %vm340 = vcmp.eq.f32.partialorder %v330, 0.0
        %v341 = vand.u32 %v330, 2147483648
        %v342 = vsel %vm340, %v341, %v339
        %v343 = vadd.f32 %v342, 1e-08
        %v344 = vrcp.pop %v343
        %v345 = vmul.f32 %v343, %v344
        %v346 = vsub.f32 1.0, %v345
        %v347 = vmul.f32 %v344, %v346
        %v348 = vadd.f32 %v344, %v347
        %vm349 = vweird.f32 %v343
        %vm350 = vweird.f32 %v344
        %vm351 = vmor %vm349, %vm350
        %v352 = vsel %vm351, %v344, %v348
        %v353 = vand.u32 2147483647, %v343
        %vm354 = vcmp.eq.f32.partialorder %v353, 8.507059e+37
        %v355 = vand.u32 %v343, 2147483648
        %v356 = vor.u32 1.1754944e-38, %v355
        %v357 = vsel %vm354, %v356, %v352
        %v358 = vmul.f32 %v327, %v357
        %359 = vst [vmem:[%s280] sm:$0xff] %v358
        %v360 = vld [vmem:[%s4] sm:$0xff]
        %v361 = vld [vmem:[%s4 + $0x8] sm:$0xff]
        %v362 = vld [vmem:[%s4 + $0x10] sm:$0xff]
        %v363 = vld [vmem:[%s4 + $0x18] sm:$0xff]
        %v364 = vld [vmem:[%s4 + $0x20] sm:$0xff]
        %v365 = vld [vmem:[%s4 + $0x28] sm:$0xff]
        %v366 = vld [vmem:[%s4 + $0x30] sm:$0xff]
        %v367 = vld [vmem:[%s4 + $0x38] sm:$0xff]
        %v368 = vld [vmem:[%s4 + $0x40] sm:$0xff]
        %v369 = vld [vmem:[%s4 + $0x48] sm:$0xff]
        %v370 = vld [vmem:[%s4 + $0x50] sm:$0xff]
        %v371 = vld [vmem:[%s4 + $0x58] sm:$0xff]
        %v372 = vld [vmem:[%s4 + $0x60] sm:$0xff]
        %v373 = vld [vmem:[%s4 + $0x68] sm:$0xff]
        %v374 = vld [vmem:[%s4 + $0x70] sm:$0xff]
        %v375 = vld [vmem:[%s4 + $0x78] sm:$0xff]
        %v376 = vld [vmem:[%s5] sm:$0x1]
        %v378 = vperm.slane %v376, 0
        %380 = vmatpush.msra.mxu0 %v375
        %381 = vmatpush.msra.mxu0 %v374
        %382 = vmatpush.msra.mxu0 %v373
        %383 = vmatpush.msra.mxu0 %v372
        %384 = vmatpush.msra.mxu0 %v371
        %385 = vmatpush.msra.mxu0 %v370
        %386 = vmatpush.msra.mxu0 %v369
        %387 = vmatpush.msra.mxu0 %v368
        %388 = vmatpush.msra.mxu0 %v367
        %389 = vmatpush.msra.mxu0 %v366
        %390 = vmatpush.msra.mxu0 %v365
        %391 = vmatpush.msra.mxu0 %v364
        %392 = vmatpush.msra.mxu0 %v363
        %393 = vmatpush.msra.mxu0 %v362
        %394 = vmatpush.msra.mxu0 %v361
        %395 = vmatpush.msra.mxu0 %v360
        %396 = vmatmul.f32.gmra.mxu0 %v327
        %v397 = vpop.f32.mrf.mxu0
        %v398 = vadd.f32 %v378, %v397
        %399 = vdwg.mxu0
        %vm400 = vcmask 130048
        %401 = vst.msk [vmem:[%s273] sm:$0xff] %vm400, %v398
        %s402 = sand.u32 %s164, 1
        %s403 = scalar_lea.sflag [#allocation3], %s402
        %s404 = sand.u32 %s164, 1
        %s405 = smul.addr %s404, 8
        %s406 = scalar_lea.vmem [#allocation2], %s405
        %s407 = sand.u32 %s190, 1
        %s408 = scalar_lea.sflag [#allocation5], %s407
        %s409 = sand.u32 %s190, 1
        %s410 = smul.addr %s409, 8
        %s411 = scalar_lea.vmem [#allocation4], %s410
        // Predicated region
        $region45: #{class_block_forward.1} parent=43 // pred_check
          %p412 = pneg %p174
        $region46: #{class_block_forward.1} parent=43 // pred_check_branch
          %414 = sbr.rel (%p412) target = $region48
        $region47: #{class_block_forward.1} parent=43 // pred_region
          %416 = vsyncadd %s403, 0
          %s417 = smul.addr %s25, 8
          %s418 = scalar_lea.hbm %s6, %s417
          %s420 = sshll.u32 %s406, 4
          %s421 = int_to_ptr.vmem [resolvable:$true] %s420
          %s422 = sshll.u32 %s418, 4
          %s423 = int_to_ptr.hbm [resolvable:$true] %s422
          %425 = dma.vmem_to_hbm [thread:$0]  %s421, 128, %s423, %s403
        $region48: #{class_block_forward.1} parent=43 // pred_fallthru
          _
        // Predicated region
        $region49: #{class_block_forward.1} parent=43 // pred_check
          %p426 = pneg %p200
        $region50: #{class_block_forward.1} parent=43 // pred_check_branch
          %428 = sbr.rel (%p426) target = $region52
        $region51: #{class_block_forward.1} parent=43 // pred_region
          %430 = vsyncadd %s408, 0
          %s431 = smul.addr %s25, 8
          %s432 = scalar_lea.hbm %s7, %s431
          %s434 = sshll.u32 %s411, 4
          %s435 = int_to_ptr.vmem [resolvable:$true] %s434
          %s436 = sshll.u32 %s432, 4
          %s437 = int_to_ptr.hbm [resolvable:$true] %s436
          %439 = dma.vmem_to_hbm [thread:$0]  %s435, 128, %s437, %s408
        $region52: #{class_block_forward.1} parent=43 // pred_fallthru
          _
      $region44: #{class_block_forward.1} parent=5 // pred_fallthru
        _
      %p440 = scmp.le.s32.totalorder 2, %s20
      // Predicated region
      $region53: #{class_block_forward.1} parent=5 // pred_check
        %p441 = pneg %p440
      $region54: #{class_block_forward.1} parent=5 // pred_check_branch
        %443 = sbr.rel (%p441) target = $region56
      $region55: #{class_block_forward.1} parent=5 // pred_region
        %s444 = ssub.s32 %s20, 2
        // Predicated region
        $region57: #{class_block_forward.1} parent=55 // pred_check
          %p445 = pneg %p180
        $region58: #{class_block_forward.1} parent=55 // pred_check_branch
          %447 = sbr.rel (%p445) target = $region60
        $region59: #{class_block_forward.1} parent=55 // pred_region
          %s448 = sand.u32 %s165, 1
          %s449 = scalar_lea.sflag [#allocation3], %s448
          %s450 = sand.u32 %s165, 1
          %s451 = smul.addr %s450, 8
          %s452 = scalar_lea.vmem [#allocation2], %s451
          %454 = dma.done %s449, 128
        $region60: #{class_block_forward.1} parent=55 // pred_fallthru
          _
        // Predicated region
        $region61: #{class_block_forward.1} parent=55 // pred_check
          %p455 = pneg %p206
        $region62: #{class_block_forward.1} parent=55 // pred_check_branch
          %457 = sbr.rel (%p455) target = $region64
        $region63: #{class_block_forward.1} parent=55 // pred_region
          %s458 = sand.u32 %s191, 1
          %s459 = scalar_lea.sflag [#allocation5], %s458
          %s460 = sand.u32 %s191, 1
          %s461 = smul.addr %s460, 8
          %s462 = scalar_lea.vmem [#allocation4], %s461
          %464 = dma.done %s459, 128
        $region64: #{class_block_forward.1} parent=55 // pred_fallthru
          _
      $region56: #{class_block_forward.1} parent=5 // pred_fallthru
        _
    $region6: #{class_block_forward.1} parent=1 // loop_footer
      %s24 = sadd.s32 1, %s20
    $region7: #{class_block_forward.1} parent=1 // loop_footer_branch
      %19 = sbr.rel target = $region3
    $region8: #{class_block_forward.1} parent=1 // loop_exit
      _
    %465 = vsyncpa [#allocation3], 1
    %s466 = scalar_lea.sflag [#allocation3], 1
    %467 = vsyncpa %s466, 1
    %468 = vsyncpa [#allocation5], 1
    %s469 = scalar_lea.sflag [#allocation5], 1
    %470 = vsyncpa %s469, 1

</llo_original>
